<compile_context>
chip_gen: v7x
topology: tpu7x:2x2x1
jax: 0.10.0
libtpu: 0.0.40
codegen_flags: <defaults>
</compile_context>

<pallas_src>
import jax
import jax.numpy as jnp
from jax.experimental import pallas as pl
from jax.experimental.pallas import tpu as pltpu


# --------------------------------------------------------------------------- #
# Kernel
# --------------------------------------------------------------------------- #
def _wrapper_kernel(x_ref, w1_ref, w2_ref, b2_ref, w3_ref, b3_ref, o_ref):
    """One fused 3-layer MLP chain over a (tm, Dp) row tile of the stacked
    (current | positive | negative) condition batch.

      x_ref : (tm, Dp)  bf16   columns = [coords | temperature | 1 | 0-pad]
      w1_ref: (Dp, H)   bf16   rows    = [scale*W1_coords | W1_temp | b1 | 0-pad]
      w2_ref: (H, H)    bf16
      b2_ref: (1, H)    f32
      w3_ref: (H, R)    bf16
      b3_ref: (1, R)    f32
      o_ref : (tm, R)   f32
    """
    # Layer 1 — scale, temperature column and bias are all folded into w1 / the
    # ones column: a single bf16 MXU pass with f32 accumulation, no slicing.
    h1 = jnp.tanh(jnp.dot(x_ref[...], w1_ref[...],
                          preferred_element_type=jnp.float32))
    # Layer 2 — bf16 operands, f32 accumulate, f32 bias/tanh (EUP slot).
    h2 = jnp.tanh(jnp.dot(h1.astype(jnp.bfloat16), w2_ref[...],
                          preferred_element_type=jnp.float32) + b2_ref[...])
    # Layer 3 — representation head.
    o_ref[...] = (jnp.dot(h2.astype(jnp.bfloat16), w3_ref[...],
                          preferred_element_type=jnp.float32)
                  + b3_ref[...]).astype(o_ref.dtype)


def _run_wrapper_mlp(x_all, w1p, w2, b2, w3, b3, rep_dim):
    M, Dp = x_all.shape

    # 16-row granularity (bf16 sublane packing). Size the tile so that the row
    # grid has >= 2 steps as soon as there is enough work (v7x megacore) while
    # capping per-step VMEM; Pallas masks the partial trailing block.
    tm = min(1024, 16 * pl.cdiv(M, 32))
    grid = (pl.cdiv(M, tm),)

    def resident(a):  # same block every step -> DMA'd once, stays in VMEM
        return pl.BlockSpec(a.shape, lambda i: (0, 0))

    return pl.pallas_call(
        _wrapper_kernel,
        grid=grid,
        in_specs=[pl.BlockSpec((tm, Dp), lambda i: (i, 0)),
                  resident(w1p), resident(w2), resident(b2),
                  resident(w3), resident(b3)],
        out_specs=pl.BlockSpec((tm, rep_dim), lambda i: (i, 0)),
        out_shape=jax.ShapeDtypeStruct((M, rep_dim), jnp.float32),
        compiler_params=pltpu.CompilerParams(
            dimension_semantics=("parallel",)),
    )(x_all, w1p, w2, b2, w3, b3)


# --------------------------------------------------------------------------- #
# Parameters
# --------------------------------------------------------------------------- #
def init_params(key, input_dim, hidden_dim, rep_dim):
    k1, k2, k3 = jax.random.split(key, 3)
    w1 = jax.random.normal(k1, (input_dim, hidden_dim), jnp.float32) * 0.1
    b1 = jnp.zeros((1, hidden_dim), jnp.float32)
    w2 = jax.random.normal(k2, (hidden_dim, hidden_dim), jnp.float32) * 0.1
    b2 = jnp.zeros((1, hidden_dim), jnp.float32)
    w3 = jax.random.normal(k3, (hidden_dim, rep_dim), jnp.float32) * 0.1
    b3 = jnp.zeros((1, rep_dim), jnp.float32)
    return (w1, b1, w2, b2, w3, b3)


def pack_params(params, scale, data_dim):
    """Fold cfg.data.scale into W1's coordinate rows, append the temperature row
    and the bias row (matched by a ones column in the input), zero-pad the
    contraction dim to a multiple of 8, and store matmul weights in bf16.
    Biases for layers 2/3 stay as tiny f32 buffers (no in-kernel slicing)."""
    w1, b1, w2, b2, w3, b3 = params
    hidden = w1.shape[1]
    dp = ((data_dim + 2 + 7) // 8) * 8
    p1 = jnp.zeros((dp, hidden), jnp.float32)
    p1 = p1.at[:data_dim, :].set(w1[:data_dim] * jnp.float32(scale))  # scaled coords
    p1 = p1.at[data_dim, :].set(w1[data_dim])                         # temperature row
    p1 = p1.at[data_dim + 1, :].set(b1.reshape(-1))                   # bias (ones col)
    return (p1.astype(jnp.bfloat16),
            w2.astype(jnp.bfloat16), b2.reshape(1, -1).astype(jnp.float32),
            w3.astype(jnp.bfloat16), b3.reshape(1, -1).astype(jnp.float32))


# --------------------------------------------------------------------------- #
# Forward (mirrors ModelWrapper.forward)
# --------------------------------------------------------------------------- #
def _assemble_conditions(current_state, positive_sample, negative_sample,
                         temperature, dp):
    """Stack the three flattened sample batches, append the shared temperature
    column, a ones column (bias), and zero padding up to dp features."""
    batch = current_state.shape[0]
    x = jnp.concatenate([current_state.reshape(batch, -1),
                         positive_sample.reshape(batch, -1),
                         negative_sample.reshape(batch, -1)],
                        axis=0).astype(jnp.float32)                      # (3B, d)
    d = x.shape[1]
    t = jnp.tile(temperature.reshape(batch, 1).astype(jnp.float32), (3, 1))
    ones = jnp.ones((3 * batch, 1), jnp.float32)
    pad = jnp.zeros((3 * batch, dp - d - 2), jnp.float32)
    return jnp.concatenate([x, t, ones, pad], axis=1).astype(jnp.bfloat16)


def model_wrapper_forward(current_state, positive_sample, negative_sample,
                          temperature, packed_params):
    w1p, w2, b2, w3, b3 = packed_params
    batch = current_state.shape[0]
    dp = w1p.shape[0]
    rep_dim = w3.shape[1]

    d = current_state.reshape(batch, -1).shape[1]
    assert dp >= d + 2, "packed W1 inconsistent with data_dim"

    x_all = _assemble_conditions(current_state, positive_sample,
                                 negative_sample, temperature, dp)
    out = _run_wrapper_mlp(x_all, w1p, w2, b2, w3, b3, rep_dim)   # (3B, rep)
    return {
        "current_state_rep": out[:batch],
        "positive_sample_rep": out[batch:2 * batch],
        "negative_sample_rep": out[2 * batch:3 * batch],
    }


# --------------------------------------------------------------------------- #
# Demo / self-check
# --------------------------------------------------------------------------- #
if __name__ == "__main__":
    # alanine-like config: batch=8, atoms=7 -> data_dim=21, input_dim=22
    batch = 8
    atoms = 7
    data_dim = atoms * 3
    input_dim = data_dim + 1
    hidden_dim = 128      # keep 128 (optimal on v5e MXU); 256 would suit v6e/v7x
    rep_dim = 2
    scale = 2.0

    key = jax.random.PRNGKey(0)
    kp, kc, kpos, kneg, kt = jax.random.split(key, 5)

    params = init_params(kp, input_dim, hidden_dim, rep_dim)
    packed = pack_params(params, scale, data_dim)

    current_state = jax.random.normal(kc, (batch, atoms, 3), jnp.float32)
    positive_sample = jax.random.normal(kpos, (batch, atoms, 3), jnp.float32)
    negative_sample = jax.random.normal(kneg, (batch, atoms, 3), jnp.float32)
    temperature = jax.random.uniform(kt, (batch, 1), jnp.float32,
                                     minval=300.0, maxval=400.0)

    out = model_wrapper_forward(current_state, positive_sample, negative_sample,
                                temperature, packed)
    jax.block_until_ready(out)
    out_stacked = jnp.concatenate([out["current_state_rep"],
                                   out["positive_sample_rep"],
                                   out["negative_sample_rep"]], axis=0)

    # --- Check 1 (tight gate): plain-JAX reference with identical bf16 cast
    #     points and f32 accumulation — must match the kernel closely.
    w1p, w2b, b2f, w3b, b3f = packed
    dp = w1p.shape[0]
    x_all_ref = _assemble_conditions(current_state, positive_sample,
                                     negative_sample, temperature, dp)
    h1r = jnp.tanh(jnp.dot(x_all_ref, w1p, preferred_element_type=jnp.float32))
    h2r = jnp.tanh(jnp.dot(h1r.astype(jnp.bfloat16), w2b,
                           preferred_element_type=jnp.float32) + b2f)
    ref_bf16 = jnp.dot(h2r.astype(jnp.bfloat16), w3b,
                       preferred_element_type=jnp.float32) + b3f
    assert jnp.allclose(out_stacked, ref_bf16, atol=1e-3, rtol=1e-3), \
        "kernel does not match bf16-emulated reference"

    # --- Check 2 (semantic sanity): original torch forward in full f32.
    #     bf16 MXU operands give ~1e-2 level deviation -> loose tolerance.
    w1, b1, w2, b2, w3, b3 = params

    def ref_model(x):
        h1 = jnp.tanh(jnp.dot(x, w1, precision="highest") + b1)
        h2 = jnp.tanh(jnp.dot(h1, w2, precision="highest") + b2)
        return jnp.dot(h2, w3, precision="highest") + b3

    temp_col = temperature.reshape(batch, -1)
    checks = (("current_state_rep", current_state),
              ("positive_sample_rep", positive_sample),
              ("negative_sample_rep", negative_sample))
    for name, sample in checks:
        cond = jnp.concatenate(
            [sample.reshape(batch, -1) * scale, temp_col], axis=1)
        ref = ref_model(cond)
        assert jnp.allclose(out[name], ref, atol=1e-1, rtol=1e-1), \
            f"mismatch in {name} vs f32 reference"

    print("KERNEL_OK")
</pallas_src>

<mosaic_0001>
module attributes {stable_mosaic.version = 11 : i64} {
  func.func @_wrapper_kernel(%arg0: i32, %arg1: memref<16x24xbf16, #tpu.memory_space<vmem>>, %arg2: memref<24x128xbf16, #tpu.memory_space<vmem>>, %arg3: memref<128x128xbf16, #tpu.memory_space<vmem>>, %arg4: memref<1x128xf32, #tpu.memory_space<vmem>>, %arg5: memref<128x2xbf16, #tpu.memory_space<vmem>>, %arg6: memref<1x2xf32, #tpu.memory_space<vmem>>, %arg7: memref<16x2xf32, #tpu.memory_space<vmem>>) attributes {dimension_semantics = [#tpu.dimension_semantics<parallel>], iteration_bounds = array<i64: 2>, scalar_prefetch = 0 : i64, scratch_operands = 0 : i64, tpu.core_type = #tpu.core_type<tc>, window_params = [{transform_indices = @transform_0, window_bounds = array<i64: 16, 24>}, {pipeline_mode = #tpu.pipeline_mode<synchronous>, transform_indices = @transform_1, window_bounds = array<i64: 24, 128>}, {pipeline_mode = #tpu.pipeline_mode<synchronous>, transform_indices = @transform_2, window_bounds = array<i64: 128, 128>}, {pipeline_mode = #tpu.pipeline_mode<synchronous>, transform_indices = @transform_3, window_bounds = array<i64: 1, 128>}, {pipeline_mode = #tpu.pipeline_mode<synchronous>, transform_indices = @transform_4, window_bounds = array<i64: 128, 2>}, {pipeline_mode = #tpu.pipeline_mode<synchronous>, transform_indices = @transform_5, window_bounds = array<i64: 1, 2>}, {transform_indices = @transform_6, window_bounds = array<i64: 16, 2>}]} {
    %c0 = arith.constant 0 : index
    %c0_0 = arith.constant 0 : index
    %0 = vector.load %arg1[%c0, %c0_0] : memref<16x24xbf16, #tpu.memory_space<vmem>>, vector<16x24xbf16>
    %c0_1 = arith.constant 0 : index
    %c0_2 = arith.constant 0 : index
    %1 = vector.load %arg2[%c0_1, %c0_2] : memref<24x128xbf16, #tpu.memory_space<vmem>>, vector<24x128xbf16>
    %cst = arith.constant dense<0.000000e+00> : vector<16x128xf32>
    %2 = tpu.matmul %0, %1, %cst {dimension_numbers = #tpu.dot_dimension_numbers<[1], [0], [0], [1], [0, 0, 1, 1], [], []>} : vector<16x24xbf16>, vector<24x128xbf16>, vector<16x128xf32> -> vector<16x128xf32>
    %3 = math.tanh %2 : vector<16x128xf32>
    %4 = arith.truncf %3 : vector<16x128xf32> to vector<16x128xbf16>
    %c0_3 = arith.constant 0 : index
    %c0_4 = arith.constant 0 : index
    %5 = vector.load %arg3[%c0_3, %c0_4] : memref<128x128xbf16, #tpu.memory_space<vmem>>, vector<128x128xbf16>
    %cst_5 = arith.constant dense<0.000000e+00> : vector<16x128xf32>
    %6 = tpu.matmul %4, %5, %cst_5 {dimension_numbers = #tpu.dot_dimension_numbers<[1], [0], [0], [1], [0, 0, 1, 1], [], []>} : vector<16x128xbf16>, vector<128x128xbf16>, vector<16x128xf32> -> vector<16x128xf32>
    %c0_6 = arith.constant 0 : index
    %c0_7 = arith.constant 0 : index
    %7 = vector.load %arg4[%c0_6, %c0_7] : memref<1x128xf32, #tpu.memory_space<vmem>>, vector<1x128xf32>
    %8 = vector.broadcast %7 : vector<1x128xf32> to vector<16x128xf32>
    %9 = arith.addf %6, %8 : vector<16x128xf32>
    %10 = math.tanh %9 : vector<16x128xf32>
    %11 = arith.truncf %10 : vector<16x128xf32> to vector<16x128xbf16>
    %c0_8 = arith.constant 0 : index
    %c0_9 = arith.constant 0 : index
    %12 = vector.load %arg5[%c0_8, %c0_9] : memref<128x2xbf16, #tpu.memory_space<vmem>>, vector<128x2xbf16>
    %cst_10 = arith.constant dense<0.000000e+00> : vector<16x2xf32>
    %13 = tpu.matmul %11, %12, %cst_10 {dimension_numbers = #tpu.dot_dimension_numbers<[1], [0], [0], [1], [0, 0, 1, 1], [], []>} : vector<16x128xbf16>, vector<128x2xbf16>, vector<16x2xf32> -> vector<16x2xf32>
    %c0_11 = arith.constant 0 : index
    %c0_12 = arith.constant 0 : index
    %14 = vector.load %arg6[%c0_11, %c0_12] : memref<1x2xf32, #tpu.memory_space<vmem>>, vector<1x2xf32>
    %15 = vector.broadcast %14 : vector<1x2xf32> to vector<16x2xf32>
    %16 = arith.addf %13, %15 : vector<16x2xf32>
    %c0_13 = arith.constant 0 : index
    %c0_14 = arith.constant 0 : index
    %17 = vector.load %arg7[%c0_13, %c0_14] : memref<16x2xf32, #tpu.memory_space<vmem>>, vector<16x2xf32>
    tpu.vector_store %arg7[%c0_13, %c0_14], %16 {strides = array<i32>} : memref<16x2xf32, #tpu.memory_space<vmem>>, vector<16x2xf32>,
    return
  }
  func.func @transform_0(%arg0: i32) -> (i32, i32) {
    %c0_i32 = arith.constant 0 : i32
    %c0_i32_0 = arith.constant 0 : i32
    return %arg0, %c0_i32 : i32, i32
  }
  func.func @transform_1(%arg0: i32) -> (i32, i32) {
    %c0_i32 = arith.constant 0 : i32
    %c0_i32_0 = arith.constant 0 : i32
    %c0_i32_1 = arith.constant 0 : i32
    return %c0_i32, %c0_i32_0 : i32, i32
  }
  func.func @transform_2(%arg0: i32) -> (i32, i32) {
    %c0_i32 = arith.constant 0 : i32
    %c0_i32_0 = arith.constant 0 : i32
    %c0_i32_1 = arith.constant 0 : i32
    return %c0_i32, %c0_i32_0 : i32, i32
  }
  func.func @transform_3(%arg0: i32) -> (i32, i32) {
    %c0_i32 = arith.constant 0 : i32
    %c0_i32_0 = arith.constant 0 : i32
    %c0_i32_1 = arith.constant 0 : i32
    return %c0_i32, %c0_i32_0 : i32, i32
  }
  func.func @transform_4(%arg0: i32) -> (i32, i32) {
    %c0_i32 = arith.constant 0 : i32
    %c0_i32_0 = arith.constant 0 : i32
    %c0_i32_1 = arith.constant 0 : i32
    return %c0_i32, %c0_i32_0 : i32, i32
  }
  func.func @transform_5(%arg0: i32) -> (i32, i32) {
    %c0_i32 = arith.constant 0 : i32
    %c0_i32_0 = arith.constant 0 : i32
    %c0_i32_1 = arith.constant 0 : i32
    return %c0_i32, %c0_i32_0 : i32, i32
  }
  func.func @transform_6(%arg0: i32) -> (i32, i32) {
    %c0_i32 = arith.constant 0 : i32
    %c0_i32_0 = arith.constant 0 : i32
    return %arg0, %c0_i32 : i32, i32
  }
}

</mosaic_0001>

<llo_original>
// kernel: tpu_custom_call.1
$region0: #{tpu_custom_call.1}
  #allocation0 [shape = 'u32[]', space=smem, size = 0x4, offset = 0x4, fixed_abs, tag = 'smem constant byte address 0x4 - core index']
  #allocation1 [shape = 'u32[144,128]{1,0:T(1,128)}', space=vmem, size = 0x12000, scoped, tag = 'internal scratch']
  %s0 = inlined_call_operand.hbm [shape: bf16[24,24], index: 0, kind: input, shape index: {}]
  %s1 = inlined_call_operand.hbm [shape: bf16[24,128], index: 1, kind: input, shape index: {}]
  %s2 = inlined_call_operand.vmem [shape: bf16[128,128], index: 2, kind: input, shape index: {}]
  %s3 = inlined_call_operand.vmem [shape: f32[1,128], index: 3, kind: input, shape index: {}]
  %s4 = inlined_call_operand.vmem [shape: bf16[128,2], index: 4, kind: input, shape index: {}]
  %s5 = inlined_call_operand.vmem [shape: f32[1,2], index: 5, kind: input, shape index: {}]
  %s6 = inlined_call_operand.vmem [shape: f32[24,2], index: 6, kind: output, shape index: {}]
  %s7 = sld [smem:[#allocation0]]
  $region113: #{tpu_custom_call.1} parent=0
    _
  %s9 = ssub.s32 1, %s7
  %s10 = scalar_select 0, %s9, %s7
  $region1: #{tpu_custom_call.1} parent=0
    #allocation2 [shape = 'u8[8192]{0}', space=vmem, size = 0x2000, scoped, tag = 'input window, operand 0']
    #allocation3 [shape = 's32[2]{0}', space=sflag, size = 0x8, scoped, tag = 'scoped memory for tpu_custom_call.1']
    #allocation4 [shape = 'u8[6144]{0}', space=vmem, size = 0x1800, scoped, tag = 'input window, operand 1, single buffered']
    #allocation5 [shape = 's32[1]{0}', space=sflag, size = 0x4, scoped, tag = 'scoped memory for tpu_custom_call.1']
    #allocation6 [shape = 'u8[16384]{0}', space=vmem, size = 0x4000, scoped, tag = 'output window, operand 0']
    %11 = vsyncpa [#allocation3], 0
    %s12 = scalar_lea.sflag [#allocation3], 1
    %13 = vsyncpa %s12, 0
    %14 = vsyncpa [#allocation5], 0
    loop: start=0, step=1, limit=4
    $region2: #{tpu_custom_call.1} parent=1 // loop_pre_header
      _
    $region3: #{tpu_custom_call.1} parent=1 // loop_header
      %s16 = sphi 0, %s20
      %p17 = scmp.ge.s32.totalorder %s16, 4
      %s26 = sphi 0, %s28
      %s29 = sphi 0, %s26
      %s30 = sphi 0, %s29
      %s46 = sphi 0, %s30
      %s50 = sphi 0, %s50
      %s52 = sphi 0, %s50
      %s53 = sphi 0, %s52
      %s67 = sphi 0, %s53
      %s71 = sphi 0, %s71
      %s73 = sphi 0, %s71
      %s74 = sphi 0, %s73
      %s88 = sphi 0, %s74
      %s92 = sphi 0, %s92
      %s94 = sphi 0, %s92
      %s95 = sphi 0, %s94
      %s109 = sphi 0, %s95
      %s113 = sphi 0, %s113
      %s115 = sphi 0, %s113
      %s116 = sphi 0, %s115
      %s130 = sphi 0, %s116
      %s134 = sphi 0, %s134
      %s136 = sphi 0, %s134
      %s137 = sphi 0, %s136
      %s151 = sphi 0, %s137
      %s157 = sphi 0, %s159
      %s160 = sphi 0, %s157
      %s161 = sphi 0, %s160
      %s177 = sphi 0, %s161
    $region4: #{tpu_custom_call.1} parent=1 // loop_header_branch
      %19 = sbr.rel (%p17) target = $region8
    $region5: #{tpu_custom_call.1} parent=1 // loop_body
      %s21 = ssub.s32 %s16, 1
      %s22 = ssub.s32 %s16, 2
      %s23 = sadd.s32 %s16, 1
      %s24 = ssub.s32 %s16, %s23
      %p25 = scmp.eq.s32.totalorder %s24, 0
      %s27 = sadd.s32 %s26, 1
      %s28 = scalar_select %p25, %s26, %s27
      %p31 = pneg %p25
      %p32 = scmp.eq.s32.totalorder %s16, 1
      %p33 = por %p31, %p32
      %p34 = scmp.ne.s32.totalorder %s26, %s29
      %p35 = scmp.eq.s32.totalorder %s16, 0
      %p36 = por %p34, %p35
      %p37 = scmp.ne.s32.totalorder %s26, %s29
      %p38 = scmp.eq.s32.totalorder %s21, 1
      %p39 = por %p37, %p38
      %p40 = scmp.ne.s32.totalorder %s29, %s30
      %p41 = scmp.eq.s32.totalorder %s21, 0
      %p42 = por %p40, %p41
      %p43 = scmp.ne.s32.totalorder %s29, %s30
      %p44 = scmp.eq.s32.totalorder %s22, 1
      %p45 = por %p43, %p44
      %p47 = scmp.ne.s32.totalorder %s30, %s46
      %p48 = scmp.eq.s32.totalorder %s22, 0
      %p49 = por %p47, %p48
      %s51 = sadd.s32 %s50, 1
      %p54 = scmp.eq.s32.totalorder %s16, 1
      %p55 = scmp.ne.s32.totalorder %s50, %s52
      %p56 = scmp.eq.s32.totalorder %s16, 0
      %p57 = por %p55, %p56
      %p58 = scmp.ne.s32.totalorder %s50, %s52
      %p59 = scmp.eq.s32.totalorder %s21, 1
      %p60 = por %p58, %p59
      %p61 = scmp.ne.s32.totalorder %s52, %s53
      %p62 = scmp.eq.s32.totalorder %s21, 0
      %p63 = por %p61, %p62
      %p64 = scmp.ne.s32.totalorder %s52, %s53
      %p65 = scmp.eq.s32.totalorder %s22, 1
      %p66 = por %p64, %p65
      %p68 = scmp.ne.s32.totalorder %s53, %s67
      %p69 = scmp.eq.s32.totalorder %s22, 0
      %p70 = por %p68, %p69
      %s72 = sadd.s32 %s71, 1
      %p75 = scmp.eq.s32.totalorder %s16, 1
      %p76 = scmp.ne.s32.totalorder %s71, %s73
      %p77 = scmp.eq.s32.totalorder %s16, 0
      %p78 = por %p76, %p77
      %p79 = scmp.ne.s32.totalorder %s71, %s73
      %p80 = scmp.eq.s32.totalorder %s21, 1
      %p81 = por %p79, %p80
      %p82 = scmp.ne.s32.totalorder %s73, %s74
      %p83 = scmp.eq.s32.totalorder %s21, 0
      %p84 = por %p82, %p83
      %p85 = scmp.ne.s32.totalorder %s73, %s74
      %p86 = scmp.eq.s32.totalorder %s22, 1
      %p87 = por %p85, %p86
      %p89 = scmp.ne.s32.totalorder %s74, %s88
      %p90 = scmp.eq.s32.totalorder %s22, 0
      %p91 = por %p89, %p90
      %s93 = sadd.s32 %s92, 1
      %p96 = scmp.eq.s32.totalorder %s16, 1
      %p97 = scmp.ne.s32.totalorder %s92, %s94
      %p98 = scmp.eq.s32.totalorder %s16, 0
      %p99 = por %p97, %p98
      %p100 = scmp.ne.s32.totalorder %s92, %s94
      %p101 = scmp.eq.s32.totalorder %s21, 1
      %p102 = por %p100, %p101
      %p103 = scmp.ne.s32.totalorder %s94, %s95
      %p104 = scmp.eq.s32.totalorder %s21, 0
      %p105 = por %p103, %p104
      %p106 = scmp.ne.s32.totalorder %s94, %s95
      %p107 = scmp.eq.s32.totalorder %s22, 1
      %p108 = por %p106, %p107
      %p110 = scmp.ne.s32.totalorder %s95, %s109
      %p111 = scmp.eq.s32.totalorder %s22, 0
      %p112 = por %p110, %p111
      %s114 = sadd.s32 %s113, 1
      %p117 = scmp.eq.s32.totalorder %s16, 1
      %p118 = scmp.ne.s32.totalorder %s113, %s115
      %p119 = scmp.eq.s32.totalorder %s16, 0
      %p120 = por %p118, %p119
      %p121 = scmp.ne.s32.totalorder %s113, %s115
      %p122 = scmp.eq.s32.totalorder %s21, 1
      %p123 = por %p121, %p122
      %p124 = scmp.ne.s32.totalorder %s115, %s116
      %p125 = scmp.eq.s32.totalorder %s21, 0
      %p126 = por %p124, %p125
      %p127 = scmp.ne.s32.totalorder %s115, %s116
      %p128 = scmp.eq.s32.totalorder %s22, 1
      %p129 = por %p127, %p128
      %p131 = scmp.ne.s32.totalorder %s116, %s130
      %p132 = scmp.eq.s32.totalorder %s22, 0
      %p133 = por %p131, %p132
      %s135 = sadd.s32 %s134, 1
      %p138 = scmp.eq.s32.totalorder %s16, 1
      %p139 = scmp.ne.s32.totalorder %s134, %s136
      %p140 = scmp.eq.s32.totalorder %s16, 0
      %p141 = por %p139, %p140
      %p142 = scmp.ne.s32.totalorder %s134, %s136
      %p143 = scmp.eq.s32.totalorder %s21, 1
      %p144 = por %p142, %p143
      %p145 = scmp.ne.s32.totalorder %s136, %s137
      %p146 = scmp.eq.s32.totalorder %s21, 0
      %p147 = por %p145, %p146
      %p148 = scmp.ne.s32.totalorder %s136, %s137
      %p149 = scmp.eq.s32.totalorder %s22, 1
      %p150 = por %p148, %p149
      %p152 = scmp.ne.s32.totalorder %s137, %s151
      %p153 = scmp.eq.s32.totalorder %s22, 0
      %p154 = por %p152, %p153
      %s155 = ssub.s32 %s16, %s23
      %p156 = scmp.eq.s32.totalorder %s155, 0
      %s158 = sadd.s32 %s157, 1
      %s159 = scalar_select %p156, %s157, %s158
      %p162 = pneg %p156
      %p163 = scmp.eq.s32.totalorder %s16, 1
      %p164 = por %p162, %p163
      %p165 = scmp.ne.s32.totalorder %s157, %s160
      %p166 = scmp.eq.s32.totalorder %s16, 0
      %p167 = por %p165, %p166
      %p168 = scmp.ne.s32.totalorder %s157, %s160
      %p169 = scmp.eq.s32.totalorder %s21, 1
      %p170 = por %p168, %p169
      %p171 = scmp.ne.s32.totalorder %s160, %s161
      %p172 = scmp.eq.s32.totalorder %s21, 0
      %p173 = por %p171, %p172
      %p174 = scmp.ne.s32.totalorder %s160, %s161
      %p175 = scmp.eq.s32.totalorder %s22, 1
      %p176 = por %p174, %p175
      %p178 = scmp.ne.s32.totalorder %s161, %s177
      %p179 = scmp.eq.s32.totalorder %s22, 0
      %p180 = por %p178, %p179
      %p181 = scmp.le.s32.totalorder 1, %s16
      %p182 = scmp.lt.s32.totalorder %s16, 3
      %p183 = pnand %p181, %p182
      %p184 = pneg %p183
      // Predicated region
      $region9: #{tpu_custom_call.1} parent=5 // pred_check
        _
      $region10: #{tpu_custom_call.1} parent=5 // pred_check_branch
        %186 = sbr.rel (%p183) target = $region12
      $region11: #{tpu_custom_call.1} parent=5 // pred_region
        %s187 = ssub.s32 %s16, 1
        // Predicated region
        $region13: #{tpu_custom_call.1} parent=11 // pred_check
          %p188 = pneg %p63
        $region14: #{tpu_custom_call.1} parent=11 // pred_check_branch
          %190 = sbr.rel (%p188) target = $region16
        $region15: #{tpu_custom_call.1} parent=11 // pred_region
          %s192 = ssub.s32 192, 192
          %193 = vsyncadd [#allocation5], %s192
          %s194 = sshll.u32 [#allocation4], 4
          %s195 = int_to_ptr.vmem [resolvable:$true] %s194
          %200 = dma.hbm_to_vmem [thread:$0]  %s1, 192, %s195, [#allocation5], 64, 64, 4
        $region16: #{tpu_custom_call.1} parent=11 // pred_fallthru
          _
        // Predicated region
        $region17: #{tpu_custom_call.1} parent=11 // pred_check
          %p201 = pneg %p84
        $region18: #{tpu_custom_call.1} parent=11 // pred_check_branch
          %203 = sbr.rel (%p201) target = $region20
        $region19: #{tpu_custom_call.1} parent=11 // pred_region
          _
        $region20: #{tpu_custom_call.1} parent=11 // pred_fallthru
          _
        // Predicated region
        $region21: #{tpu_custom_call.1} parent=11 // pred_check
          %p204 = pneg %p105
        $region22: #{tpu_custom_call.1} parent=11 // pred_check_branch
          %206 = sbr.rel (%p204) target = $region24
        $region23: #{tpu_custom_call.1} parent=11 // pred_region
          _
        $region24: #{tpu_custom_call.1} parent=11 // pred_fallthru
          _
        // Predicated region
        $region25: #{tpu_custom_call.1} parent=11 // pred_check
          %p207 = pneg %p126
        $region26: #{tpu_custom_call.1} parent=11 // pred_check_branch
          %209 = sbr.rel (%p207) target = $region28
        $region27: #{tpu_custom_call.1} parent=11 // pred_region
          _
        $region28: #{tpu_custom_call.1} parent=11 // pred_fallthru
          _
        // Predicated region
        $region29: #{tpu_custom_call.1} parent=11 // pred_check
          %p210 = pneg %p147
        $region30: #{tpu_custom_call.1} parent=11 // pred_check_branch
          %212 = sbr.rel (%p210) target = $region32
        $region31: #{tpu_custom_call.1} parent=11 // pred_region
          _
        $region32: #{tpu_custom_call.1} parent=11 // pred_fallthru
          _
      $region12: #{tpu_custom_call.1} parent=5 // pred_fallthru
        _
      %p213 = scmp.lt.s32.totalorder %s16, 2
      // Predicated region
      $region33: #{tpu_custom_call.1} parent=5 // pred_check
        %p214 = pneg %p213
      $region34: #{tpu_custom_call.1} parent=5 // pred_check_branch
        %216 = sbr.rel (%p214) target = $region36
      $region35: #{tpu_custom_call.1} parent=5 // pred_region
        // Predicated region
        $region37: #{tpu_custom_call.1} parent=35 // pred_check
          %p217 = pneg %p36
        $region38: #{tpu_custom_call.1} parent=35 // pred_check_branch
          %219 = sbr.rel (%p217) target = $region40
        $region39: #{tpu_custom_call.1} parent=35 // pred_region
          %s220 = sand.u32 %s26, 1
          %s221 = scalar_lea.sflag [#allocation3], %s220
          %s222 = sand.u32 %s26, 1
          %s223 = smul.addr %s222, 8
          %s224 = scalar_lea.vmem [#allocation2], %s223
          %s225 = smul.u32 2, %s16
          %s226 = ssub.s32 3, %s225
          %p227 = scmp.lt.s32.totalorder %s226, 2
          %s228 = scalar_select %p227, %s226, 2
          %s229 = smul.u32 64, %s228
          %s231 = ssub.s32 128, %s229
          %232 = vsyncadd %s221, %s231
          %p233 = scmp.ne.s32.totalorder 0, %s229
          %s234 = smul.addr %s225, 64
          %s235 = scalar_lea.hbm %s0, %s234
          %s236 = smul.u32 4, %s228
          %s237 = sshll.u32 %s224, 4
          %s238 = int_to_ptr.vmem [resolvable:$true] %s237
          %s239 = sshll.u32 %s236, 4
          %243 = dma.hbm_to_vmem [thread:$0]  (%p233), %s235, %s239, %s238, %s221, 64, 64, 4
        $region40: #{tpu_custom_call.1} parent=35 // pred_fallthru
          _
      $region36: #{tpu_custom_call.1} parent=5 // pred_fallthru
        _
      %p244 = scmp.le.s32.totalorder 1, %s16
      %p245 = scmp.lt.s32.totalorder %s16, 3
      %p246 = pnand %p244, %p245
      %p247 = pneg %p246
      // Predicated region
      $region41: #{tpu_custom_call.1} parent=5 // pred_check
        _
      $region42: #{tpu_custom_call.1} parent=5 // pred_check_branch
        %249 = sbr.rel (%p246) target = $region44
      $region43: #{tpu_custom_call.1} parent=5 // pred_region
        %s250 = ssub.s32 %s16, 1
        %s251 = sand.u32 %s29, 1
        %s252 = scalar_lea.sflag [#allocation3], %s251
        %s253 = sand.u32 %s29, 1
        %s254 = smul.addr %s253, 8
        %s255 = scalar_lea.vmem [#allocation2], %s254
        // Predicated region
        $region45: #{tpu_custom_call.1} parent=43 // pred_check
          %p256 = pneg %p42
        $region46: #{tpu_custom_call.1} parent=43 // pred_check_branch
          %258 = sbr.rel (%p256) target = $region48
        $region47: #{tpu_custom_call.1} parent=43 // pred_region
          %259 = dma.done %s252, 128
        $region48: #{tpu_custom_call.1} parent=43 // pred_fallthru
          _
        // Predicated region
        $region49: #{tpu_custom_call.1} parent=43 // pred_check
          %p260 = pneg %p63
        $region50: #{tpu_custom_call.1} parent=43 // pred_check_branch
          %262 = sbr.rel (%p260) target = $region52
        $region51: #{tpu_custom_call.1} parent=43 // pred_region
          %263 = dma.done [#allocation5], 192
        $region52: #{tpu_custom_call.1} parent=43 // pred_fallthru
          _
        %s264 = sand.u32 %s29, 1
        %s265 = scalar_lea.sflag [#allocation3], %s264
        %s266 = sand.u32 %s29, 1
        %s267 = smul.addr %s266, 8
        %s268 = scalar_lea.vmem [#allocation2], %s267
        %p269 = pneg %p42
        %p270 = pneg %p39
        %p271 = pneg %p63
        %p272 = pneg %p60
        %p273 = pneg %p84
        %p274 = pneg %p81
        %p275 = pneg %p105
        %p276 = pneg %p102
        %p277 = pneg %p126
        %p278 = pneg %p123
        %p279 = pneg %p147
        %p280 = pneg %p144
        %p281 = pneg %p173
        %p282 = pneg %p170
        %s283 = sand.u32 %s160, 1
        %s284 = sand.u32 %s160, 1
        %s285 = smul.addr %s284, 16
        %s286 = scalar_lea.vmem [#allocation6], %s285
        %s287 = smul.u32 2, %s21
        %s288 = ssub.s32 3, %s287
        %p289 = scmp.lt.s32.totalorder %s288, 2
        %s290 = scalar_select %p289, %s288, 2
        %s291 = smul.u32 64, %s290
        %s292 = smul.u32 2, %s21
        %s293 = ssub.s32 3, %s292
        %p294 = scmp.lt.s32.totalorder %s293, 2
        %s295 = scalar_select %p294, %s293, 2
        %s296 = smul.u32 128, %s295
        %v298 = vld [vmem:[%s255] sm:$0xf]
        %v299 = vld [vmem:[%s255 + $0x4] sm:$0xf]
        %v300 = vld [vmem:[#allocation4] sm:$0xf]
        %v301 = vld [vmem:[#allocation4 + $0x4] sm:$0xf]
        %v302 = vld [vmem:[#allocation4 + $0x8] sm:$0xf]
        %v305 = vunpack.c.l.b16 %v298
        %v306 = vunpack.c.l.b16 %v299
        %v307 = vpack.c.b16 %v306, %v305
        %v311 = vunpack.c.l.b16 %v300
        %v312 = vunpack.c.l.b16 %v301
        %v313 = vunpack.c.l.b16 %v302
        %v314 = vpack.c.b16 %v312, %v311
        %v315 = vpack.c.b16 %v313, %v313
        %vm317 = vcmask 195584
        %v319 = vsel %vm317, %v307, 0
        %vm321 = vcmask 1043456
        %v323 = vsel %vm321, %v315, 0
        %325 = vmatprep.subr.bf16.mxu0 0
        %326 = vmatpush1.bf16.msra.mxu0 %v314
        %327 = vmatprep.subr.bf16.mxu0 0
        %328 = vmatpush1.bf16.msra.mxu0 %v323
        %329 = vmatprep.subr.bf16.mxu0 0
        %330 = vmatpush1.bf16.msra.mxu0 0
        %331 = vmatprep.subr.bf16.mxu0 0
        %332 = vmatpush1.bf16.msra.mxu0 0
        %333 = vmatprep.subr.bf16.mxu0 0
        %334 = vmatpush1.bf16.msra.mxu0 0
        %335 = vmatprep.subr.bf16.mxu0 0
        %336 = vmatpush1.bf16.msra.mxu0 0
        %337 = vmatprep.subr.bf16.mxu0 0
        %338 = vmatpush1.bf16.msra.mxu0 0
        %339 = vmatprep.subr.bf16.mxu0 0
        %340 = vmatpush1.bf16.msra.mxu0 0
        %341 = vmatprep.subr.bf16.mxu0 0
        %342 = vmatpush1.bf16.msra.mxu0 0
        %343 = vmatprep.subr.bf16.mxu0 0
        %344 = vmatpush1.bf16.msra.mxu0 0
        %345 = vmatprep.subr.bf16.mxu0 0
        %346 = vmatpush1.bf16.msra.mxu0 0
        %347 = vmatprep.subr.bf16.mxu0 0
        %348 = vmatpush1.bf16.msra.mxu0 0
        %349 = vmatprep.subr.bf16.mxu0 0
        %350 = vmatpush1.bf16.msra.mxu0 0
        %351 = vmatprep.subr.bf16.mxu0 0
        %352 = vmatpush1.bf16.msra.mxu0 0
        %353 = vmatprep.subr.bf16.mxu0 0
        %354 = vmatpush1.bf16.msra.mxu0 0
        %355 = vmatprep.subr.bf16.mxu0 0
        %356 = vmatpush1.bf16.msra.mxu0 0
        %357 = vmatprep.mubr.bf16.mxu0 0
        %358 = vmatmul.mubr.bf16.gmra.mrb[0].mxu0 %v319
        %v359 = vpop.f32.mrb[0].mxu0
        %v360 = vadd.f32 0.0, %v359
        %v361 = vpop.f32.mrb[0].mxu0
        %v362 = vpop.f32.mrb[0].mxu0
        %v363 = vadd.f32 0.0, %v362
        %v364 = vpop.f32.mrb[0].mxu0
        %365 = vdwg.mxu0
        %v366 = vtanh.pop %v360
        %v367 = vtanh.pop %v363
        %v368 = vpack.c.bf16 %v367, %v366
        %v369 = vld [vmem:[%s2] sm:$0xf]
        %v370 = vld [vmem:[%s2 + $0x4] sm:$0xf]
        %v371 = vld [vmem:[%s2 + $0x8] sm:$0xf]
        %v372 = vld [vmem:[%s2 + $0xc] sm:$0xf]
        %v373 = vld [vmem:[%s2 + $0x10] sm:$0xf]
        %v374 = vld [vmem:[%s2 + $0x14] sm:$0xf]
        %v375 = vld [vmem:[%s2 + $0x18] sm:$0xf]
        %v376 = vld [vmem:[%s2 + $0x1c] sm:$0xf]
        %v377 = vld [vmem:[%s2 + $0x20] sm:$0xf]
        %v378 = vld [vmem:[%s2 + $0x24] sm:$0xf]
        %v379 = vld [vmem:[%s2 + $0x28] sm:$0xf]
        %v380 = vld [vmem:[%s2 + $0x2c] sm:$0xf]
        %v381 = vld [vmem:[%s2 + $0x30] sm:$0xf]
        %v382 = vld [vmem:[%s2 + $0x34] sm:$0xf]
        %v383 = vld [vmem:[%s2 + $0x38] sm:$0xf]
        %v384 = vld [vmem:[%s2 + $0x3c] sm:$0xf]
        %v385 = vld [vmem:[%s3] sm:$0x1]
        %v387 = vlaneseq
        %v388 = vshrl.u32 %v387, 7
        %v389 = vsub.s32 0, %v388
        %v390 = vrot.slane %v385, %v389
        %v408 = vunpack.c.l.b16 %v369
        %v409 = vunpack.c.l.b16 %v370
        %v410 = vunpack.c.l.b16 %v371
        %v411 = vunpack.c.l.b16 %v372
        %v412 = vunpack.c.l.b16 %v373
        %v413 = vunpack.c.l.b16 %v374
        %v414 = vunpack.c.l.b16 %v375
        %v415 = vunpack.c.l.b16 %v376
        %v416 = vunpack.c.l.b16 %v377
        %v417 = vunpack.c.l.b16 %v378
        %v418 = vunpack.c.l.b16 %v379
        %v419 = vunpack.c.l.b16 %v380
        %v420 = vunpack.c.l.b16 %v381
        %v421 = vunpack.c.l.b16 %v382
        %v422 = vunpack.c.l.b16 %v383
        %v423 = vunpack.c.l.b16 %v384
        %v424 = vpack.c.b16 %v409, %v408
        %v425 = vpack.c.b16 %v411, %v410
        %v426 = vpack.c.b16 %v413, %v412
        %v427 = vpack.c.b16 %v415, %v414
        %v428 = vpack.c.b16 %v417, %v416
        %v429 = vpack.c.b16 %v419, %v418
        %v430 = vpack.c.b16 %v421, %v420
        %v431 = vpack.c.b16 %v423, %v422
        %440 = vmatprep.subr.bf16.mxu0 0
        %441 = vmatpush1.bf16.msra.mxu0 %v424
        %442 = vmatprep.subr.bf16.mxu0 0
        %443 = vmatpush1.bf16.msra.mxu0 %v425
        %444 = vmatprep.subr.bf16.mxu0 0
        %445 = vmatpush1.bf16.msra.mxu0 %v426
        %446 = vmatprep.subr.bf16.mxu0 0
        %447 = vmatpush1.bf16.msra.mxu0 %v427
        %448 = vmatprep.subr.bf16.mxu0 0
        %449 = vmatpush1.bf16.msra.mxu0 %v428
        %450 = vmatprep.subr.bf16.mxu0 0
        %451 = vmatpush1.bf16.msra.mxu0 %v429
        %452 = vmatprep.subr.bf16.mxu0 0
        %453 = vmatpush1.bf16.msra.mxu0 %v430
        %454 = vmatprep.subr.bf16.mxu0 0
        %455 = vmatpush1.bf16.msra.mxu0 %v431
        %456 = vmatprep.subr.bf16.mxu0 0
        %457 = vmatpush1.bf16.msra.mxu0 0
        %458 = vmatprep.subr.bf16.mxu0 0
        %459 = vmatpush1.bf16.msra.mxu0 0
        %460 = vmatprep.subr.bf16.mxu0 0
        %461 = vmatpush1.bf16.msra.mxu0 0
        %462 = vmatprep.subr.bf16.mxu0 0
        %463 = vmatpush1.bf16.msra.mxu0 0
        %464 = vmatprep.subr.bf16.mxu0 0
        %465 = vmatpush1.bf16.msra.mxu0 0
        %466 = vmatprep.subr.bf16.mxu0 0
        %467 = vmatpush1.bf16.msra.mxu0 0
        %468 = vmatprep.subr.bf16.mxu0 0
        %469 = vmatpush1.bf16.msra.mxu0 0
        %470 = vmatprep.subr.bf16.mxu0 0
        %471 = vmatpush1.bf16.msra.mxu0 0
        %472 = vmatprep.mubr.bf16.mxu0 0
        %473 = vmatmul.mubr.bf16.gmra.mrb[0].mxu0 %v368
        %v474 = vpop.f32.mrb[0].mxu0
        %v475 = vadd.f32 %v390, %v474
        %v476 = vpop.f32.mrb[0].mxu0
        %v477 = vpop.f32.mrb[0].mxu0
        %v478 = vadd.f32 %v390, %v477
        %v479 = vpop.f32.mrb[0].mxu0
        %480 = vdwg.mxu0
        %v481 = vtanh.pop %v475
        %v482 = vtanh.pop %v478
        %v483 = vpack.c.bf16 %v482, %v481
        %v484 = vld [vmem:[%s4] sm:$0xf]
        %v485 = vld [vmem:[%s4 + $0x4] sm:$0xf]
        %v486 = vld [vmem:[%s4 + $0x8] sm:$0xf]
        %v487 = vld [vmem:[%s4 + $0xc] sm:$0xf]
        %v488 = vld [vmem:[%s4 + $0x10] sm:$0xf]
        %v489 = vld [vmem:[%s4 + $0x14] sm:$0xf]
        %v490 = vld [vmem:[%s4 + $0x18] sm:$0xf]
        %v491 = vld [vmem:[%s4 + $0x1c] sm:$0xf]
        %v492 = vld [vmem:[%s4 + $0x20] sm:$0xf]
        %v493 = vld [vmem:[%s4 + $0x24] sm:$0xf]
        %v494 = vld [vmem:[%s4 + $0x28] sm:$0xf]
        %v495 = vld [vmem:[%s4 + $0x2c] sm:$0xf]
        %v496 = vld [vmem:[%s4 + $0x30] sm:$0xf]
        %v497 = vld [vmem:[%s4 + $0x34] sm:$0xf]
        %v498 = vld [vmem:[%s4 + $0x38] sm:$0xf]
        %v499 = vld [vmem:[%s4 + $0x3c] sm:$0xf]
        %v500 = vld [vmem:[%s5] sm:$0x1]
        %v502 = vlaneseq
        %v503 = vshrl.u32 %v502, 7
        %v504 = vsub.s32 0, %v503
        %v505 = vrot.slane %v500, %v504
        %v523 = vunpack.c.l.b16 %v484
        %v524 = vunpack.c.l.b16 %v485
        %v525 = vunpack.c.l.b16 %v486
        %v526 = vunpack.c.l.b16 %v487
        %v527 = vunpack.c.l.b16 %v488
        %v528 = vunpack.c.l.b16 %v489
        %v529 = vunpack.c.l.b16 %v490
        %v530 = vunpack.c.l.b16 %v491
        %v531 = vunpack.c.l.b16 %v492
        %v532 = vunpack.c.l.b16 %v493
        %v533 = vunpack.c.l.b16 %v494
        %v534 = vunpack.c.l.b16 %v495
        %v535 = vunpack.c.l.b16 %v496
        %v536 = vunpack.c.l.b16 %v497
        %v537 = vunpack.c.l.b16 %v498
        %v538 = vunpack.c.l.b16 %v499
        %v539 = vpack.c.b16 %v524, %v523
        %v540 = vpack.c.b16 %v526, %v525
        %v541 = vpack.c.b16 %v528, %v527
        %v542 = vpack.c.b16 %v530, %v529
        %v543 = vpack.c.b16 %v532, %v531
        %v544 = vpack.c.b16 %v534, %v533
        %v545 = vpack.c.b16 %v536, %v535
        %v546 = vpack.c.b16 %v538, %v537
        %555 = vmatprep.subr.bf16.mxu0 0
        %556 = vmatpush1.bf16.msra.mxu0 %v539
        %557 = vmatprep.subr.bf16.mxu0 0
        %558 = vmatpush1.bf16.msra.mxu0 %v540
        %559 = vmatprep.subr.bf16.mxu0 0
        %560 = vmatpush1.bf16.msra.mxu0 %v541
        %561 = vmatprep.subr.bf16.mxu0 0
        %562 = vmatpush1.bf16.msra.mxu0 %v542
        %563 = vmatprep.subr.bf16.mxu0 0
        %564 = vmatpush1.bf16.msra.mxu0 %v543
        %565 = vmatprep.subr.bf16.mxu0 0
        %566 = vmatpush1.bf16.msra.mxu0 %v544
        %567 = vmatprep.subr.bf16.mxu0 0
        %568 = vmatpush1.bf16.msra.mxu0 %v545
        %569 = vmatprep.subr.bf16.mxu0 0
        %570 = vmatpush1.bf16.msra.mxu0 %v546
        %571 = vmatprep.subr.bf16.mxu0 0
        %572 = vmatpush1.bf16.msra.mxu0 0
        %573 = vmatprep.subr.bf16.mxu0 0
        %574 = vmatpush1.bf16.msra.mxu0 0
        %575 = vmatprep.subr.bf16.mxu0 0
        %576 = vmatpush1.bf16.msra.mxu0 0
        %577 = vmatprep.subr.bf16.mxu0 0
        %578 = vmatpush1.bf16.msra.mxu0 0
        %579 = vmatprep.subr.bf16.mxu0 0
        %580 = vmatpush1.bf16.msra.mxu0 0
        %581 = vmatprep.subr.bf16.mxu0 0
        %582 = vmatpush1.bf16.msra.mxu0 0
        %583 = vmatprep.subr.bf16.mxu0 0
        %584 = vmatpush1.bf16.msra.mxu0 0
        %585 = vmatprep.subr.bf16.mxu0 0
        %586 = vmatpush1.bf16.msra.mxu0 0
        %587 = vmatprep.mubr.bf16.mxu0 0
        %588 = vmatmul.mubr.bf16.gmra.mrb[0].mxu0 %v483
        %v589 = vpop.f32.mrb[0].mxu0
        %v590 = vadd.f32 %v505, %v589
        %v591 = vpop.f32.mrb[0].mxu0
        %v592 = vpop.f32.mrb[0].mxu0
        %v593 = vadd.f32 %v505, %v592
        %v594 = vpop.f32.mrb[0].mxu0
        %595 = vdwg.mxu0
        %vm596 = vcmask 15360
        %597 = vst.msk [vmem:[%s286] sm:$0xff] %vm596, %v590
        %598 = vst.msk [vmem:[%s286 + $0x8] sm:$0xff] %vm596, %v593
        %s599 = sand.u32 %s160, 1
        %s600 = sand.u32 %s160, 1
        %s601 = smul.addr %s600, 16
        %s602 = scalar_lea.vmem [#allocation6], %s601
        // Predicated region
        $region53: #{tpu_custom_call.1} parent=43 // pred_check
          %p603 = pneg %p170
        $region54: #{tpu_custom_call.1} parent=43 // pred_check_branch
          %605 = sbr.rel (%p603) target = $region56
        $region55: #{tpu_custom_call.1} parent=43 // pred_region
          %s606 = smul.u32 2, %s21
          %s607 = ssub.s32 3, %s606
          %p608 = scmp.lt.s32.totalorder %s607, 2
          %s609 = scalar_select %p608, %s607, 2
          %s610 = smul.u32 128, %s609
          %p611 = scmp.ne.s32.totalorder 0, %s610
          %s612 = smul.addr %s606, 8
          %s613 = scalar_lea.vmem %s6, %s612
          // Predicated region
          $region57: #{tpu_custom_call.1} parent=55 // pred_check
            %p614 = pneg %p611
          $region58: #{tpu_custom_call.1} parent=55 // pred_check_branch
            %616 = sbr.rel (%p614) target = $region60
          $region59: #{tpu_custom_call.1} parent=55 // pred_region
            // Predicated region
            $region61: #{tpu_custom_call.1} parent=59 // pred_check
              _
            $region62: #{tpu_custom_call.1} parent=59 // pred_check_branch
              %618 = sbr.rel (0) target = $region64
            $region63: #{tpu_custom_call.1} parent=59 // pred_region
              // Predicated region
              $region83: #{tpu_custom_call.1} parent=63 // pred_check
                _
              $region84: #{tpu_custom_call.1} parent=63 // pred_check_branch
                %669 = sbr.rel (0) target = $region86
              $region85: #{tpu_custom_call.1} parent=63 // pred_region
                %s670 = sshrl.u32 %s609, 1
                // While loop
                $region87: #{tpu_custom_call.1} parent=85 // loop_pre_header
                  _
                $region88: #{tpu_custom_call.1} parent=85 // loop_header
                  %s672 = sphi 0, %s674
                  %p673 = scmp.ge.s32.totalorder %s672, %s670
                  %s677 = sphi 0, %s686
                  %s678 = sphi %s602, %s689
                  %s679 = sphi %s613, %s690
                $region89: #{tpu_custom_call.1} parent=85 // loop_header_branch
                  %676 = sbr.rel (%p673) target = $region93
                $region90: #{tpu_custom_call.1} parent=85 // loop_body
                  %v680 = vld [vmem:[%s678] sm:$0xff]
                  %681 = vst [vmem:[%s679] sm:$0xff] %v680
                  %v682 = vld [vmem:[%s678 + $0x8] sm:$0xff]
                  %683 = vst [vmem:[%s679 + $0x8] sm:$0xff] %v682
                  %s684 = sadd.s32 1, %s677
                  %p685 = scmp.ge.s32.totalorder %s684, %s670
                  %s686 = scalar_select %p685, 0, %s684
                  %s687 = smul.u32 %s686, 16
                  %s688 = smul.u32 %s686, 16
                  %s689 = scalar_lea.vmem %s602, %s687 [#allocation6]
                  %s690 = scalar_lea.vmem %s613, %s688
                $region91: #{tpu_custom_call.1} parent=85 // loop_footer
                  %s674 = sadd.s32 %s672, 1
                $region92: #{tpu_custom_call.1} parent=85 // loop_footer_branch
                  %671 = sbr.rel target = $region88
                $region93: #{tpu_custom_call.1} parent=85 // loop_exit
                  _
                %s691 = sshrl.u32 %s609, 1
                %s692 = sand.u32 %s609, 1
                %s693 = smul.u32 %s691, 2
                %s694 = smul.u32 8, %s693
                %s695 = scalar_lea.vmem %s602, %s694 [#allocation6]
                %s696 = smul.u32 8, %s693
                %s697 = scalar_lea.vmem %s613, %s696
                // While loop
                $region94: #{tpu_custom_call.1} parent=85 // loop_pre_header
                  _
                $region95: #{tpu_custom_call.1} parent=85 // loop_header
                  %s699 = sphi 0, %s701
                  %p700 = scmp.ge.s32.totalorder %s699, %s692
                  %s704 = sphi 0, %s711
                  %s705 = sphi %s695, %s714
                  %s706 = sphi %s697, %s715
                $region96: #{tpu_custom_call.1} parent=85 // loop_header_branch
                  %703 = sbr.rel (%p700) target = $region100
                $region97: #{tpu_custom_call.1} parent=85 // loop_body
                  %v707 = vld [vmem:[%s705] sm:$0xff]
                  %708 = vst [vmem:[%s706] sm:$0xff] %v707
                  %s709 = sadd.s32 1, %s704
                  %p710 = scmp.ge.s32.totalorder %s709, %s692
                  %s711 = scalar_select %p710, 0, %s709
                  %s712 = smul.u32 %s711, 8
                  %s713 = smul.u32 %s711, 8
                  %s714 = scalar_lea.vmem %s695, %s712 [#allocation6]
                  %s715 = scalar_lea.vmem %s697, %s713
                $region98: #{tpu_custom_call.1} parent=85 // loop_footer
                  %s701 = sadd.s32 %s699, 1
                $region99: #{tpu_custom_call.1} parent=85 // loop_footer_branch
                  %698 = sbr.rel target = $region95
                $region100: #{tpu_custom_call.1} parent=85 // loop_exit
                  _
              $region86: #{tpu_custom_call.1} parent=63 // pred_fallthru
                _
              // Predicated region
              $region101: #{tpu_custom_call.1} parent=63 // pred_check
                _
              $region102: #{tpu_custom_call.1} parent=63 // pred_check_branch
                %717 = sbr.rel target = $region104
              $region103: #{tpu_custom_call.1} parent=63 // pred_region
                _
              $region104: #{tpu_custom_call.1} parent=63 // pred_fallthru
                _
            $region64: #{tpu_custom_call.1} parent=59 // pred_fallthru
              _
            // Predicated region
            $region65: #{tpu_custom_call.1} parent=59 // pred_check
              _
            $region66: #{tpu_custom_call.1} parent=59 // pred_check_branch
              %620 = sbr.rel target = $region68
            $region67: #{tpu_custom_call.1} parent=59 // pred_region
              %s622 = sshrl.u32 %s609, 1
              // While loop
              $region69: #{tpu_custom_call.1} parent=67 // loop_pre_header
                _
              $region70: #{tpu_custom_call.1} parent=67 // loop_header
                %s624 = sphi 0, %s626
                %p625 = scmp.ge.s32.totalorder %s624, %s622
                %s629 = sphi 0, %s638
                %s630 = sphi %s602, %s641
                %s631 = sphi %s613, %s642
              $region71: #{tpu_custom_call.1} parent=67 // loop_header_branch
                %628 = sbr.rel (%p625) target = $region75
              $region72: #{tpu_custom_call.1} parent=67 // loop_body
                %v632 = vld [vmem:[%s630] sm:$0xff]
                %633 = vst [vmem:[%s631] sm:$0xff] %v632
                %v634 = vld [vmem:[%s630 + $0x8] sm:$0xff]
                %635 = vst [vmem:[%s631 + $0x8] sm:$0xff] %v634
                %s636 = sadd.s32 1, %s629
                %p637 = scmp.ge.s32.totalorder %s636, %s622
                %s638 = scalar_select %p637, 0, %s636
                %s639 = smul.u32 %s638, 16
                %s640 = smul.u32 %s638, 16
                %s641 = scalar_lea.vmem %s602, %s639 [#allocation6]
                %s642 = scalar_lea.vmem %s613, %s640
              $region73: #{tpu_custom_call.1} parent=67 // loop_footer
                %s626 = sadd.s32 %s624, 1
              $region74: #{tpu_custom_call.1} parent=67 // loop_footer_branch
                %623 = sbr.rel target = $region70
              $region75: #{tpu_custom_call.1} parent=67 // loop_exit
                _
              %s643 = sshrl.u32 %s609, 1
              %s644 = sand.u32 %s609, 1
              %s645 = smul.u32 %s643, 2
              %s646 = smul.u32 8, %s645
              %s647 = scalar_lea.vmem %s602, %s646 [#allocation6]
              %s648 = smul.u32 8, %s645
              %s649 = scalar_lea.vmem %s613, %s648
              // While loop
              $region76: #{tpu_custom_call.1} parent=67 // loop_pre_header
                _
              $region77: #{tpu_custom_call.1} parent=67 // loop_header
                %s651 = sphi 0, %s653
                %p652 = scmp.ge.s32.totalorder %s651, %s644
                %s656 = sphi 0, %s663
                %s657 = sphi %s647, %s666
                %s658 = sphi %s649, %s667
              $region78: #{tpu_custom_call.1} parent=67 // loop_header_branch
                %655 = sbr.rel (%p652) target = $region82
              $region79: #{tpu_custom_call.1} parent=67 // loop_body
                %v659 = vld [vmem:[%s657] sm:$0xff]
                %660 = vst [vmem:[%s658] sm:$0xff] %v659
                %s661 = sadd.s32 1, %s656
                %p662 = scmp.ge.s32.totalorder %s661, %s644
                %s663 = scalar_select %p662, 0, %s661
                %s664 = smul.u32 %s663, 8
                %s665 = smul.u32 %s663, 8
                %s666 = scalar_lea.vmem %s647, %s664 [#allocation6]
                %s667 = scalar_lea.vmem %s649, %s665
              $region80: #{tpu_custom_call.1} parent=67 // loop_footer
                %s653 = sadd.s32 %s651, 1
              $region81: #{tpu_custom_call.1} parent=67 // loop_footer_branch
                %650 = sbr.rel target = $region77
              $region82: #{tpu_custom_call.1} parent=67 // loop_exit
                _
            $region68: #{tpu_custom_call.1} parent=59 // pred_fallthru
              _
          $region60: #{tpu_custom_call.1} parent=55 // pred_fallthru
            _
          %718 = vnop
        $region56: #{tpu_custom_call.1} parent=43 // pred_fallthru
          _
      $region44: #{tpu_custom_call.1} parent=5 // pred_fallthru
        _
      %p719 = scmp.le.s32.totalorder 2, %s16
      // Predicated region
      $region105: #{tpu_custom_call.1} parent=5 // pred_check
        %p720 = pneg %p719
      $region106: #{tpu_custom_call.1} parent=5 // pred_check_branch
        %722 = sbr.rel (%p720) target = $region108
      $region107: #{tpu_custom_call.1} parent=5 // pred_region
        %s723 = ssub.s32 %s16, 2
        // Predicated region
        $region109: #{tpu_custom_call.1} parent=107 // pred_check
          %p724 = pneg %p176
        $region110: #{tpu_custom_call.1} parent=107 // pred_check_branch
          %726 = sbr.rel (%p724) target = $region112
        $region111: #{tpu_custom_call.1} parent=107 // pred_region
          %s727 = sand.u32 %s161, 1
          %s728 = sand.u32 %s161, 1
          %s729 = smul.addr %s728, 16
          %s730 = scalar_lea.vmem [#allocation6], %s729
        $region112: #{tpu_custom_call.1} parent=107 // pred_fallthru
          _
      $region108: #{tpu_custom_call.1} parent=5 // pred_fallthru
        _
    $region6: #{tpu_custom_call.1} parent=1 // loop_footer
      %s20 = sadd.s32 1, %s16
    $region7: #{tpu_custom_call.1} parent=1 // loop_footer_branch
      %15 = sbr.rel target = $region3
    $region8: #{tpu_custom_call.1} parent=1 // loop_exit
      _
    %731 = vsyncpa [#allocation3], 1
    %s732 = scalar_lea.sflag [#allocation3], 1
    %733 = vsyncpa %s732, 1
    %734 = vsyncpa [#allocation5], 1

</llo_original>
